<compile_context>
chip_gen: v7x
topology: tpu7x:2x2x1
jax: 0.10.0
libtpu: 0.0.40
codegen_flags: <defaults>
</compile_context>

<pallas_src>
import jax
import jax.numpy as jnp
from jax.experimental import pallas as pl
from jax.experimental.pallas import tpu as pltpu


def _attention_kernel(x_ref, pos_ref, w1_ref, c1_ref, w2_ref, b2_ref, o_ref):
    # x_ref  : (1, C, TP)  one batch element, one spatial tile (channels in sublanes,
    #                      flattened pixels in lanes -> lane-dense loads/stores)
    # pos_ref: (2, TP)     row 0 = normalized x coord, row 1 = normalized y coord per pixel
    # w1_ref : (Crp, C)    first Linear weight, hidden dim zero-padded to Crp (multiple of 8)
    # c1_ref : (Crp, 3)    columns [w1 @ wpx, w1 @ wpy, w1 @ bp + b1]  (pos-conv folded in)
    # w2_ref : (C, Crp)    second Linear weight (zero-padded columns)
    # b2_ref : (C, 1)
    # o_ref  : (1, C, TP)
    x = x_ref[0]                                                        # (C, TP), native dtype

    # First Linear with the 1x1 positional conv folded in (linearity of the matmul):
    #   h = w1 @ (x + pos_feat) + b1
    #     = w1 @ x + (w1 @ wpx) * px + (w1 @ wpy) * py + (w1 @ bp + b1)
    h = jnp.dot(w1_ref[...], x, preferred_element_type=jnp.float32)     # (Crp, TP), MXU
    h = (h
         + c1_ref[:, 0:1] * pos_ref[0:1, :]
         + c1_ref[:, 1:2] * pos_ref[1:2, :]
         + c1_ref[:, 2:3])
    h = jnp.maximum(h, 0.0)                                              # ReLU

    z = jnp.dot(w2_ref[...], h, preferred_element_type=jnp.float32) + b2_ref[...]   # (C, TP)

    # sigmoid via EUP exp + approximate EUP reciprocal (avoids the f32 VALU divide)
    attn = pl.reciprocal(1.0 + jnp.exp(-z), approx=True)

    o_ref[0] = (x * attn + x).astype(o_ref.dtype)


def _vmem_limit_bytes():
    """Scoped-VMEM limit for this kernel: ~3/4 of physical per-core capacity, <= 112 MiB."""
    try:
        cap = int(pltpu.get_tpu_info().vmem_capacity_bytes)
    except Exception:
        cap = 64 << 20                       # conservative fallback: v7x physical size
    return int(min(cap * 3 // 4, 112 << 20))


def _pick_spatial_tile(hw, c, vmem_limit):
    """Pick (TP, n_tiles) for the flattened pixel axis.

    TP is a multiple of 128 (or the full row when HW < 128), sized so the double-buffered
    input/output pipeline plus in-kernel f32 temporaries (~8 live (C, TP) f32 buffers) stay
    within ~70% of the scoped VMEM limit.
    """
    if hw <= 128:
        return hw, 1
    budget = int(vmem_limit * 0.7)
    max_tp = max((budget // (8 * c * 4)) // 128 * 128, 128)
    cap = min(max_tp, -(-hw // 128) * 128)
    if hw % cap == 0:
        return cap, hw // cap
    if hw % 128 == 0:
        # prefer an exact multiple-of-128 divisor (no masked tail) if a reasonably big one exists
        t = cap
        while t >= max(128, cap // 2):
            if hw % t == 0:
                return t, hw // t
            t -= 128
    # fixed TP with a masked tail block; per-pixel math is independent so padding is harmless
    return cap, -(-hw // cap)


def position_aware_lowrank_attention(x, wp, bp, w1, b1, w2, b2):
    """Pallas forward pass.

    x  : (B, C, H, W)
    wp : (C, 2)   pos_conv weight (Conv2d(2, C, 1).weight squeezed),  bp : (C,)
    w1 : (Cr, C)  first Linear weight,  b1 : (Cr,)
    w2 : (C, Cr)  second Linear weight, b2 : (C,)
    """
    B, C, H, W = x.shape
    Cr = w1.shape[0]
    HW = H * W
    f32 = jnp.float32

    # --- tiny host-side parameter prep (all O(C^2) / O(H*W)) ------------------------------
    # Normalized coordinate rows for the flattened (h*W + w) pixel order; matches
    # torch.linspace(-1, 1, n) + torch.meshgrid(indexing='xy') of the reference module.
    xs = jnp.linspace(-1.0, 1.0, W, dtype=f32)
    ys = jnp.linspace(-1.0, 1.0, H, dtype=f32)
    pos_rows = jnp.concatenate(
        [jnp.broadcast_to(xs[None, :], (H, W)).reshape(1, HW),      # varies along W
         jnp.broadcast_to(ys[:, None], (H, W)).reshape(1, HW)],     # varies along H
        axis=0)                                                      # (2, HW)

    # Zero-pad the low-rank hidden dim to a sublane multiple (exact no-op: zero rows of w1p
    # give relu(0) = 0 into zero columns of w2p).
    Crp = ((Cr + 7) // 8) * 8
    w1p = jnp.zeros((Crp, C), f32).at[:Cr, :].set(w1.astype(f32))
    w2p = jnp.zeros((C, Crp), f32).at[:, :Cr].set(w2.astype(f32))
    b1p = jnp.zeros((Crp, 1), f32).at[:Cr, 0].set(b1.astype(f32))

    # Fold the 1x1 positional conv into the first Linear, and pack the small constants.
    v1 = w1p @ wp[:, 0].astype(f32)[:, None]                     # (Crp, 1)
    v2 = w1p @ wp[:, 1].astype(f32)[:, None]                     # (Crp, 1)
    b1f = w1p @ bp.astype(f32)[:, None] + b1p                    # (Crp, 1)
    c1 = jnp.concatenate([v1, v2, b1f], axis=1)                  # (Crp, 3)
    b2c = b2.astype(f32).reshape(C, 1)

    x_flat = x.reshape(B, C, HW)                                 # pure reshape, no data movement

    vmem_limit = _vmem_limit_bytes()
    TP, n_sp = _pick_spatial_tile(HW, C, vmem_limit)

    out_flat = pl.pallas_call(
        _attention_kernel,
        out_shape=jax.ShapeDtypeStruct((B, C, HW), x.dtype),
        grid_spec=pltpu.PrefetchScalarGridSpec(
            num_scalar_prefetch=0,
            grid=(B, n_sp),
            in_specs=[
                pl.BlockSpec((1, C, TP), lambda i, j: (i, 0, j)),   # x tile
                pl.BlockSpec((2, TP), lambda i, j: (0, j)),         # pos coordinate rows
                pl.BlockSpec((Crp, C), lambda i, j: (0, 0)),        # w1 (padded, resident)
                pl.BlockSpec((Crp, 3), lambda i, j: (0, 0)),        # folded pos/bias constants
                pl.BlockSpec((C, Crp), lambda i, j: (0, 0)),        # w2 (padded, resident)
                pl.BlockSpec((C, 1), lambda i, j: (0, 0)),          # b2
            ],
            out_specs=pl.BlockSpec((1, C, TP), lambda i, j: (i, 0, j)),
        ),
        compiler_params=pltpu.CompilerParams(
            dimension_semantics=("parallel", "parallel"),
            vmem_limit_bytes=vmem_limit),
    )(x_flat, pos_rows, w1p, c1, w2p, b2c)

    return out_flat.reshape(B, C, H, W)


def position_aware_lowrank_attention_ref(x, wp, bp, w1, b1, w2, b2):
    """Pure-JAX reference mirroring the PyTorch forward exactly (f32-accurate matmuls)."""
    B, C, H, W = x.shape
    xs = jnp.linspace(-1.0, 1.0, W)
    ys = jnp.linspace(-1.0, 1.0, H)
    gx, gy = jnp.meshgrid(xs, ys, indexing="xy")                  # (H, W) each
    pos = jnp.stack([gx, gy], axis=0)                             # (2, H, W)
    pos_feat = jnp.einsum("co,ohw->chw", wp, pos, precision="highest") + bp[:, None, None]
    fused = x + pos_feat[None]
    ff = fused.reshape(B, C, H * W).transpose(0, 2, 1)            # (B, HW, C)
    h = jnp.maximum(jnp.einsum("bnc,rc->bnr", ff, w1, precision="highest") + b1, 0.0)
    a = jax.nn.sigmoid(jnp.einsum("bnr,cr->bnc", h, w2, precision="highest") + b2)
    a = a.transpose(0, 2, 1).reshape(B, C, H, W)
    return x * a + x


if __name__ == "__main__":
    # Small deterministic problem: batch=2, channels=4 (hidden=2), spatial 16x16.
    B, C, H, W = 2, 4, 16, 16
    Cr = C // 2
    key = jax.random.PRNGKey(0)
    kx, kwp, kbp, kw1, kb1, kw2, kb2 = jax.random.split(key, 7)

    x = jax.random.normal(kx, (B, C, H, W), dtype=jnp.float32)
    wp = 0.5 * jax.random.normal(kwp, (C, 2), dtype=jnp.float32)    # Conv2d(2, C, 1) weight
    bp = 0.1 * jax.random.normal(kbp, (C,), dtype=jnp.float32)
    w1 = 0.5 * jax.random.normal(kw1, (Cr, C), dtype=jnp.float32)   # Linear(C, C//2)
    b1 = 0.1 * jax.random.normal(kb1, (Cr,), dtype=jnp.float32)
    w2 = 0.5 * jax.random.normal(kw2, (C, Cr), dtype=jnp.float32)   # Linear(C//2, C)
    b2 = 0.1 * jax.random.normal(kb2, (C,), dtype=jnp.float32)

    out = jax.block_until_ready(position_aware_lowrank_attention(x, wp, bp, w1, b1, w2, b2))
    ref = jax.block_until_ready(position_aware_lowrank_attention_ref(x, wp, bp, w1, b1, w2, b2))

    assert out.shape == (B, C, H, W), out.shape
    err = float(jnp.max(jnp.abs(out - ref)))
    # approx-reciprocal sigmoid introduces small (~1e-4) drift -> slightly loosened tolerance
    assert jnp.allclose(out, ref, atol=2e-3, rtol=2e-3), err
    print("KERNEL_OK")
</pallas_src>

<mosaic_0001>
module attributes {stable_mosaic.version = 11 : i64} {
  func.func @_attention_kernel(%arg0: i32, %arg1: i32, %arg2: memref<1x4x256xf32, #tpu.memory_space<vmem>>, %arg3: memref<2x256xf32, #tpu.memory_space<vmem>>, %arg4: memref<8x4xf32, #tpu.memory_space<vmem>>, %arg5: memref<8x3xf32, #tpu.memory_space<vmem>>, %arg6: memref<4x8xf32, #tpu.memory_space<vmem>>, %arg7: memref<4x1xf32, #tpu.memory_space<vmem>>, %arg8: memref<1x4x256xf32, #tpu.memory_space<vmem>>) attributes {dimension_semantics = [#tpu.dimension_semantics<parallel>, #tpu.dimension_semantics<parallel>], iteration_bounds = array<i64: 2, 1>, scalar_prefetch = 0 : i64, scratch_operands = 0 : i64, tpu.core_type = #tpu.core_type<tc>, window_params = [{transform_indices = @transform_0, window_bounds = array<i64: 1, 4, 256>}, {transform_indices = @transform_1, window_bounds = array<i64: 2, 256>}, {pipeline_mode = #tpu.pipeline_mode<synchronous>, transform_indices = @transform_2, window_bounds = array<i64: 8, 4>}, {pipeline_mode = #tpu.pipeline_mode<synchronous>, transform_indices = @transform_3, window_bounds = array<i64: 8, 3>}, {pipeline_mode = #tpu.pipeline_mode<synchronous>, transform_indices = @transform_4, window_bounds = array<i64: 4, 8>}, {pipeline_mode = #tpu.pipeline_mode<synchronous>, transform_indices = @transform_5, window_bounds = array<i64: 4, 1>}, {transform_indices = @transform_6, window_bounds = array<i64: 1, 4, 256>}]} {
    %c0 = arith.constant 0 : index
    %c0_0 = arith.constant 0 : index
    %c0_1 = arith.constant 0 : index
    %0 = vector.load %arg2[%c0, %c0_0, %c0_1] : memref<1x4x256xf32, #tpu.memory_space<vmem>>, vector<1x4x256xf32>
    %1 = vector.shape_cast %0 : vector<1x4x256xf32> to vector<4x256xf32>
    %c0_2 = arith.constant 0 : index
    %c0_3 = arith.constant 0 : index
    %2 = vector.load %arg4[%c0_2, %c0_3] : memref<8x4xf32, #tpu.memory_space<vmem>>, vector<8x4xf32>
    %cst = arith.constant dense<0.000000e+00> : vector<8x256xf32>
    %3 = tpu.matmul %2, %1, %cst {dimension_numbers = #tpu.dot_dimension_numbers<[1], [0], [0], [1], [0, 0, 1, 1], [], []>} : vector<8x4xf32>, vector<4x256xf32>, vector<8x256xf32> -> vector<8x256xf32>
    %c0_4 = arith.constant 0 : index
    %c0_5 = arith.constant 0 : index
    %4 = vector.load %arg5[%c0_4, %c0_5] : memref<8x3xf32, #tpu.memory_space<vmem>>, vector<8x1xf32>
    %c0_6 = arith.constant 0 : index
    %c0_7 = arith.constant 0 : index
    %5 = vector.load %arg3[%c0_6, %c0_7] : memref<2x256xf32, #tpu.memory_space<vmem>>, vector<1x256xf32>
    %6 = vector.broadcast %4 : vector<8x1xf32> to vector<8x256xf32>
    %7 = vector.broadcast %5 : vector<1x256xf32> to vector<8x256xf32>
    %8 = arith.mulf %6, %7 : vector<8x256xf32>
    %9 = arith.addf %3, %8 : vector<8x256xf32>
    %c0_8 = arith.constant 0 : index
    %c1 = arith.constant 1 : index
    %10 = vector.load %arg5[%c0_8, %c1] : memref<8x3xf32, #tpu.memory_space<vmem>>, vector<8x1xf32>
    %c1_9 = arith.constant 1 : index
    %c0_10 = arith.constant 0 : index
    %11 = vector.load %arg3[%c1_9, %c0_10] : memref<2x256xf32, #tpu.memory_space<vmem>>, vector<1x256xf32>
    %12 = vector.broadcast %10 : vector<8x1xf32> to vector<8x256xf32>
    %13 = vector.broadcast %11 : vector<1x256xf32> to vector<8x256xf32>
    %14 = arith.mulf %12, %13 : vector<8x256xf32>
    %15 = arith.addf %9, %14 : vector<8x256xf32>
    %c0_11 = arith.constant 0 : index
    %c2 = arith.constant 2 : index
    %16 = vector.load %arg5[%c0_11, %c2] : memref<8x3xf32, #tpu.memory_space<vmem>>, vector<8x1xf32>
    %17 = vector.broadcast %16 : vector<8x1xf32> to vector<8x256xf32>
    %18 = arith.addf %15, %17 : vector<8x256xf32>
    %cst_12 = arith.constant 0.000000e+00 : f32
    %19 = vector.broadcast %cst_12 : f32 to vector<8x256xf32>
    %20 = arith.maximumf %18, %19 : vector<8x256xf32>
    %c0_13 = arith.constant 0 : index
    %c0_14 = arith.constant 0 : index
    %21 = vector.load %arg6[%c0_13, %c0_14] : memref<4x8xf32, #tpu.memory_space<vmem>>, vector<4x8xf32>
    %cst_15 = arith.constant dense<0.000000e+00> : vector<4x256xf32>
    %22 = tpu.matmul %21, %20, %cst_15 {dimension_numbers = #tpu.dot_dimension_numbers<[1], [0], [0], [1], [0, 0, 1, 1], [], []>} : vector<4x8xf32>, vector<8x256xf32>, vector<4x256xf32> -> vector<4x256xf32>
    %c0_16 = arith.constant 0 : index
    %c0_17 = arith.constant 0 : index
    %23 = vector.load %arg7[%c0_16, %c0_17] : memref<4x1xf32, #tpu.memory_space<vmem>>, vector<4x1xf32>
    %24 = vector.broadcast %23 : vector<4x1xf32> to vector<4x256xf32>
    %25 = arith.addf %22, %24 : vector<4x256xf32>
    %cst_18 = arith.constant 0.000000e+00 : f32
    %26 = vector.broadcast %cst_18 : f32 to vector<4x256xf32>
    %27 = arith.subf %26, %25 : vector<4x256xf32>
    %28 = math.exp %27 : vector<4x256xf32>
    %cst_19 = arith.constant 1.000000e+00 : f32
    %29 = vector.broadcast %cst_19 : f32 to vector<4x256xf32>
    %30 = arith.addf %29, %28 : vector<4x256xf32>
    %31 = tpu.reciprocal %30 {approx = true} : vector<4x256xf32> -> vector<4x256xf32>
    %32 = arith.mulf %1, %31 : vector<4x256xf32>
    %33 = arith.addf %32, %1 : vector<4x256xf32>
    %c0_20 = arith.constant 0 : index
    %c0_21 = arith.constant 0 : index
    %c0_22 = arith.constant 0 : index
    %34 = vector.load %arg8[%c0_20, %c0_21, %c0_22] : memref<1x4x256xf32, #tpu.memory_space<vmem>>, vector<1x4x256xf32>
    %35 = vector.shape_cast %34 : vector<1x4x256xf32> to vector<4x256xf32>
    %36 = vector.shape_cast %33 : vector<4x256xf32> to vector<1x4x256xf32>
    tpu.vector_store %arg8[%c0_20, %c0_21, %c0_22], %36 {strides = array<i32>} : memref<1x4x256xf32, #tpu.memory_space<vmem>>, vector<1x4x256xf32>,
    return
  }
  func.func @transform_0(%arg0: i32, %arg1: i32) -> (i32, i32, i32) {
    %c0_i32 = arith.constant 0 : i32
    %c0_i32_0 = arith.constant 0 : i32
    return %arg0, %c0_i32, %arg1 : i32, i32, i32
  }
  func.func @transform_1(%arg0: i32, %arg1: i32) -> (i32, i32) {
    %c0_i32 = arith.constant 0 : i32
    %c0_i32_0 = arith.constant 0 : i32
    return %c0_i32, %arg1 : i32, i32
  }
  func.func @transform_2(%arg0: i32, %arg1: i32) -> (i32, i32) {
    %c0_i32 = arith.constant 0 : i32
    %c0_i32_0 = arith.constant 0 : i32
    %c0_i32_1 = arith.constant 0 : i32
    return %c0_i32, %c0_i32_0 : i32, i32
  }
  func.func @transform_3(%arg0: i32, %arg1: i32) -> (i32, i32) {
    %c0_i32 = arith.constant 0 : i32
    %c0_i32_0 = arith.constant 0 : i32
    %c0_i32_1 = arith.constant 0 : i32
    return %c0_i32, %c0_i32_0 : i32, i32
  }
  func.func @transform_4(%arg0: i32, %arg1: i32) -> (i32, i32) {
    %c0_i32 = arith.constant 0 : i32
    %c0_i32_0 = arith.constant 0 : i32
    %c0_i32_1 = arith.constant 0 : i32
    return %c0_i32, %c0_i32_0 : i32, i32
  }
  func.func @transform_5(%arg0: i32, %arg1: i32) -> (i32, i32) {
    %c0_i32 = arith.constant 0 : i32
    %c0_i32_0 = arith.constant 0 : i32
    %c0_i32_1 = arith.constant 0 : i32
    return %c0_i32, %c0_i32_0 : i32, i32
  }
  func.func @transform_6(%arg0: i32, %arg1: i32) -> (i32, i32, i32) {
    %c0_i32 = arith.constant 0 : i32
    %c0_i32_0 = arith.constant 0 : i32
    return %arg0, %c0_i32, %arg1 : i32, i32, i32
  }
}

</mosaic_0001>

<llo_original>
// kernel: tpu_custom_call.1
$region0: #{tpu_custom_call.1}
  #allocation0 [shape = 'u32[]', space=smem, size = 0x4, offset = 0x4, fixed_abs, tag = 'smem constant byte address 0x4 - core index']
  #allocation1 [shape = 'u32[144,128]{1,0:T(1,128)}', space=vmem, size = 0x12000, scoped, tag = 'internal scratch']
  %s0 = inlined_call_operand.vmem [shape: f32[2,4,256], index: 0, kind: input, shape index: {}]
  %s1 = inlined_call_operand.vmem [shape: f32[2,256], index: 1, kind: input, shape index: {}]
  %s2 = inlined_call_operand.vmem [shape: f32[8,4], index: 2, kind: input, shape index: {}]
  %s3 = inlined_call_operand.vmem [shape: f32[8,3], index: 3, kind: input, shape index: {}]
  %s4 = inlined_call_operand.vmem [shape: f32[4,8], index: 4, kind: input, shape index: {}]
  %s5 = inlined_call_operand.vmem [shape: f32[4,1], index: 5, kind: input, shape index: {}]
  %s6 = inlined_call_operand.hbm [shape: f32[2,4,256], index: 6, kind: output, shape index: {}]
  %s7 = sld [smem:[#allocation0]]
  $region57: #{tpu_custom_call.1} parent=0
    _
  %s9 = ssub.s32 1, %s7
  %s10 = scalar_select 0, %s9, %s7
  $region1: #{tpu_custom_call.1} parent=0
    #allocation2 [shape = 'u8[8192]{0}', space=vmem, size = 0x2000, scoped, tag = 'output window, operand 0']
    #allocation3 [shape = 's32[2]{0}', space=sflag, size = 0x8, scoped, tag = 'scoped memory for tpu_custom_call.1']
    %11 = vsyncpa [#allocation3], 0
    %s12 = scalar_lea.sflag [#allocation3], 1
    %13 = vsyncpa %s12, 0
    loop: start=0, step=1, limit=4
    $region2: #{tpu_custom_call.1} parent=1 // loop_pre_header
      _
    $region3: #{tpu_custom_call.1} parent=1 // loop_header
      %s15 = sphi 0, %s19
      %p16 = scmp.ge.s32.totalorder %s15, 4
      %s22 = sphi 0, %s34
      %s23 = sphi 0, %s30
      %s24 = sphi 0, %s22
      %s25 = sphi 0, %s23
      %s26 = sphi 0, %s24
      %s27 = sphi 0, %s25
      %s39 = sphi 0, %s41
      %s42 = sphi 0, %s39
      %s43 = sphi 0, %s42
      %s59 = sphi 0, %s43
      %s65 = sphi 0, %s67
      %s68 = sphi 0, %s65
      %s69 = sphi 0, %s68
      %s85 = sphi 0, %s69
      %s89 = sphi 0, %s89
      %s91 = sphi 0, %s89
      %s92 = sphi 0, %s91
      %s106 = sphi 0, %s92
      %s110 = sphi 0, %s110
      %s112 = sphi 0, %s110
      %s113 = sphi 0, %s112
      %s127 = sphi 0, %s113
      %s131 = sphi 0, %s131
      %s133 = sphi 0, %s131
      %s134 = sphi 0, %s133
      %s148 = sphi 0, %s134
      %s152 = sphi 0, %s152
      %s154 = sphi 0, %s152
      %s155 = sphi 0, %s154
      %s169 = sphi 0, %s155
      %s177 = sphi 0, %s179
      %s180 = sphi 0, %s177
      %s181 = sphi 0, %s180
      %s197 = sphi 0, %s181
    $region4: #{tpu_custom_call.1} parent=1 // loop_header_branch
      %18 = sbr.rel (%p16) target = $region8
    $region5: #{tpu_custom_call.1} parent=1 // loop_body
      %s20 = ssub.s32 %s15, 1
      %s21 = ssub.s32 %s15, 2
      %s28 = sadd.s32 1, %s23
      %p29 = scmp.ge.s32.totalorder %s28, 1
      %s30 = scalar_select %p29, 0, %s28
      %s31 = sadd.s32 1, %s22
      %s32 = scalar_select %p29, %s31, %s22
      %p33 = scmp.ge.s32.totalorder %s32, 2
      %s34 = scalar_select %p33, 0, %s32
      %s35 = ssub.s32 %s22, %s34
      %s36 = ssub.s32 %s23, %s30
      %s37 = sor.u32 %s35, %s36
      %p38 = scmp.eq.s32.totalorder %s37, 0
      %s40 = sadd.s32 %s39, 1
      %s41 = scalar_select %p38, %s39, %s40
      %p44 = pneg %p38
      %p45 = scmp.eq.s32.totalorder %s15, 1
      %p46 = por %p44, %p45
      %p47 = scmp.ne.s32.totalorder %s39, %s42
      %p48 = scmp.eq.s32.totalorder %s15, 0
      %p49 = por %p47, %p48
      %p50 = scmp.ne.s32.totalorder %s39, %s42
      %p51 = scmp.eq.s32.totalorder %s20, 1
      %p52 = por %p50, %p51
      %p53 = scmp.ne.s32.totalorder %s42, %s43
      %p54 = scmp.eq.s32.totalorder %s20, 0
      %p55 = por %p53, %p54
      %p56 = scmp.ne.s32.totalorder %s42, %s43
      %p57 = scmp.eq.s32.totalorder %s21, 1
      %p58 = por %p56, %p57
      %p60 = scmp.ne.s32.totalorder %s43, %s59
      %p61 = scmp.eq.s32.totalorder %s21, 0
      %p62 = por %p60, %p61
      %s63 = ssub.s32 %s23, %s30
      %p64 = scmp.eq.s32.totalorder %s63, 0
      %s66 = sadd.s32 %s65, 1
      %s67 = scalar_select %p64, %s65, %s66
      %p70 = pneg %p64
      %p71 = scmp.eq.s32.totalorder %s15, 1
      %p72 = por %p70, %p71
      %p73 = scmp.ne.s32.totalorder %s65, %s68
      %p74 = scmp.eq.s32.totalorder %s15, 0
      %p75 = por %p73, %p74
      %p76 = scmp.ne.s32.totalorder %s65, %s68
      %p77 = scmp.eq.s32.totalorder %s20, 1
      %p78 = por %p76, %p77
      %p79 = scmp.ne.s32.totalorder %s68, %s69
      %p80 = scmp.eq.s32.totalorder %s20, 0
      %p81 = por %p79, %p80
      %p82 = scmp.ne.s32.totalorder %s68, %s69
      %p83 = scmp.eq.s32.totalorder %s21, 1
      %p84 = por %p82, %p83
      %p86 = scmp.ne.s32.totalorder %s69, %s85
      %p87 = scmp.eq.s32.totalorder %s21, 0
      %p88 = por %p86, %p87
      %s90 = sadd.s32 %s89, 1
      %p93 = scmp.eq.s32.totalorder %s15, 1
      %p94 = scmp.ne.s32.totalorder %s89, %s91
      %p95 = scmp.eq.s32.totalorder %s15, 0
      %p96 = por %p94, %p95
      %p97 = scmp.ne.s32.totalorder %s89, %s91
      %p98 = scmp.eq.s32.totalorder %s20, 1
      %p99 = por %p97, %p98
      %p100 = scmp.ne.s32.totalorder %s91, %s92
      %p101 = scmp.eq.s32.totalorder %s20, 0
      %p102 = por %p100, %p101
      %p103 = scmp.ne.s32.totalorder %s91, %s92
      %p104 = scmp.eq.s32.totalorder %s21, 1
      %p105 = por %p103, %p104
      %p107 = scmp.ne.s32.totalorder %s92, %s106
      %p108 = scmp.eq.s32.totalorder %s21, 0
      %p109 = por %p107, %p108
      %s111 = sadd.s32 %s110, 1
      %p114 = scmp.eq.s32.totalorder %s15, 1
      %p115 = scmp.ne.s32.totalorder %s110, %s112
      %p116 = scmp.eq.s32.totalorder %s15, 0
      %p117 = por %p115, %p116
      %p118 = scmp.ne.s32.totalorder %s110, %s112
      %p119 = scmp.eq.s32.totalorder %s20, 1
      %p120 = por %p118, %p119
      %p121 = scmp.ne.s32.totalorder %s112, %s113
      %p122 = scmp.eq.s32.totalorder %s20, 0
      %p123 = por %p121, %p122
      %p124 = scmp.ne.s32.totalorder %s112, %s113
      %p125 = scmp.eq.s32.totalorder %s21, 1
      %p126 = por %p124, %p125
      %p128 = scmp.ne.s32.totalorder %s113, %s127
      %p129 = scmp.eq.s32.totalorder %s21, 0
      %p130 = por %p128, %p129
      %s132 = sadd.s32 %s131, 1
      %p135 = scmp.eq.s32.totalorder %s15, 1
      %p136 = scmp.ne.s32.totalorder %s131, %s133
      %p137 = scmp.eq.s32.totalorder %s15, 0
      %p138 = por %p136, %p137
      %p139 = scmp.ne.s32.totalorder %s131, %s133
      %p140 = scmp.eq.s32.totalorder %s20, 1
      %p141 = por %p139, %p140
      %p142 = scmp.ne.s32.totalorder %s133, %s134
      %p143 = scmp.eq.s32.totalorder %s20, 0
      %p144 = por %p142, %p143
      %p145 = scmp.ne.s32.totalorder %s133, %s134
      %p146 = scmp.eq.s32.totalorder %s21, 1
      %p147 = por %p145, %p146
      %p149 = scmp.ne.s32.totalorder %s134, %s148
      %p150 = scmp.eq.s32.totalorder %s21, 0
      %p151 = por %p149, %p150
      %s153 = sadd.s32 %s152, 1
      %p156 = scmp.eq.s32.totalorder %s15, 1
      %p157 = scmp.ne.s32.totalorder %s152, %s154
      %p158 = scmp.eq.s32.totalorder %s15, 0
      %p159 = por %p157, %p158
      %p160 = scmp.ne.s32.totalorder %s152, %s154
      %p161 = scmp.eq.s32.totalorder %s20, 1
      %p162 = por %p160, %p161
      %p163 = scmp.ne.s32.totalorder %s154, %s155
      %p164 = scmp.eq.s32.totalorder %s20, 0
      %p165 = por %p163, %p164
      %p166 = scmp.ne.s32.totalorder %s154, %s155
      %p167 = scmp.eq.s32.totalorder %s21, 1
      %p168 = por %p166, %p167
      %p170 = scmp.ne.s32.totalorder %s155, %s169
      %p171 = scmp.eq.s32.totalorder %s21, 0
      %p172 = por %p170, %p171
      %s173 = ssub.s32 %s22, %s34
      %s174 = ssub.s32 %s23, %s30
      %s175 = sor.u32 %s173, %s174
      %p176 = scmp.eq.s32.totalorder %s175, 0
      %s178 = sadd.s32 %s177, 1
      %s179 = scalar_select %p176, %s177, %s178
      %p182 = pneg %p176
      %p183 = scmp.eq.s32.totalorder %s15, 1
      %p184 = por %p182, %p183
      %p185 = scmp.ne.s32.totalorder %s177, %s180
      %p186 = scmp.eq.s32.totalorder %s15, 0
      %p187 = por %p185, %p186
      %p188 = scmp.ne.s32.totalorder %s177, %s180
      %p189 = scmp.eq.s32.totalorder %s20, 1
      %p190 = por %p188, %p189
      %p191 = scmp.ne.s32.totalorder %s180, %s181
      %p192 = scmp.eq.s32.totalorder %s20, 0
      %p193 = por %p191, %p192
      %p194 = scmp.ne.s32.totalorder %s180, %s181
      %p195 = scmp.eq.s32.totalorder %s21, 1
      %p196 = por %p194, %p195
      %p198 = scmp.ne.s32.totalorder %s181, %s197
      %p199 = scmp.eq.s32.totalorder %s21, 0
      %p200 = por %p198, %p199
      %p201 = scmp.le.s32.totalorder 1, %s15
      %p202 = scmp.lt.s32.totalorder %s15, 3
      %p203 = pnand %p201, %p202
      %p204 = pneg %p203
      // Predicated region
      $region9: #{tpu_custom_call.1} parent=5 // pred_check
        _
      $region10: #{tpu_custom_call.1} parent=5 // pred_check_branch
        %206 = sbr.rel (%p203) target = $region12
      $region11: #{tpu_custom_call.1} parent=5 // pred_region
        %s207 = ssub.s32 %s15, 1
        // Predicated region
        $region13: #{tpu_custom_call.1} parent=11 // pred_check
          %p208 = pneg %p81
        $region14: #{tpu_custom_call.1} parent=11 // pred_check_branch
          %210 = sbr.rel (%p208) target = $region16
        $region15: #{tpu_custom_call.1} parent=11 // pred_region
          %s211 = smul.u32 2, %s25
          %p212 = scmp.lt.s32.totalorder %s211, 1
          %s213 = scalar_select %p212, %s211, 1
          %s214 = smul.addr %s213, 2
          %s215 = scalar_lea.vmem %s1, %s214
          %s216 = smul.u32 2, %s25
        $region16: #{tpu_custom_call.1} parent=11 // pred_fallthru
          _
        // Predicated region
        $region17: #{tpu_custom_call.1} parent=11 // pred_check
          %p217 = pneg %p102
        $region18: #{tpu_custom_call.1} parent=11 // pred_check_branch
          %219 = sbr.rel (%p217) target = $region20
        $region19: #{tpu_custom_call.1} parent=11 // pred_region
          _
        $region20: #{tpu_custom_call.1} parent=11 // pred_fallthru
          _
        // Predicated region
        $region21: #{tpu_custom_call.1} parent=11 // pred_check
          %p220 = pneg %p123
        $region22: #{tpu_custom_call.1} parent=11 // pred_check_branch
          %222 = sbr.rel (%p220) target = $region24
        $region23: #{tpu_custom_call.1} parent=11 // pred_region
          _
        $region24: #{tpu_custom_call.1} parent=11 // pred_fallthru
          _
        // Predicated region
        $region25: #{tpu_custom_call.1} parent=11 // pred_check
          %p223 = pneg %p144
        $region26: #{tpu_custom_call.1} parent=11 // pred_check_branch
          %225 = sbr.rel (%p223) target = $region28
        $region27: #{tpu_custom_call.1} parent=11 // pred_region
          _
        $region28: #{tpu_custom_call.1} parent=11 // pred_fallthru
          _
        // Predicated region
        $region29: #{tpu_custom_call.1} parent=11 // pred_check
          %p226 = pneg %p165
        $region30: #{tpu_custom_call.1} parent=11 // pred_check_branch
          %228 = sbr.rel (%p226) target = $region32
        $region31: #{tpu_custom_call.1} parent=11 // pred_region
          _
        $region32: #{tpu_custom_call.1} parent=11 // pred_fallthru
          _
      $region12: #{tpu_custom_call.1} parent=5 // pred_fallthru
        _
      %p229 = scmp.lt.s32.totalorder %s15, 2
      // Predicated region
      $region33: #{tpu_custom_call.1} parent=5 // pred_check
        %p230 = pneg %p229
      $region34: #{tpu_custom_call.1} parent=5 // pred_check_branch
        %232 = sbr.rel (%p230) target = $region36
      $region35: #{tpu_custom_call.1} parent=5 // pred_region
        // Predicated region
        $region37: #{tpu_custom_call.1} parent=35 // pred_check
          %p233 = pneg %p49
        $region38: #{tpu_custom_call.1} parent=35 // pred_check_branch
          %235 = sbr.rel (%p233) target = $region40
        $region39: #{tpu_custom_call.1} parent=35 // pred_region
          %s236 = smul.u32 2, %s23
          %p237 = scmp.lt.s32.totalorder %s22, 1
          %s238 = scalar_select %p237, %s22, 1
          %p239 = scmp.lt.s32.totalorder %s236, 1
          %s240 = scalar_select %p239, %s236, 1
          %s241 = smul.addr %s238, 2
          %s242 = sadd.s32 %s240, %s241
          %s243 = smul.addr %s242, 4
          %s244 = scalar_lea.vmem %s0, %s243
          %s245 = smul.u32 2, %s23
        $region40: #{tpu_custom_call.1} parent=35 // pred_fallthru
          _
      $region36: #{tpu_custom_call.1} parent=5 // pred_fallthru
        _
      %p246 = scmp.le.s32.totalorder 1, %s15
      %p247 = scmp.lt.s32.totalorder %s15, 3
      %p248 = pnand %p246, %p247
      %p249 = pneg %p248
      // Predicated region
      $region41: #{tpu_custom_call.1} parent=5 // pred_check
        _
      $region42: #{tpu_custom_call.1} parent=5 // pred_check_branch
        %251 = sbr.rel (%p248) target = $region44
      $region43: #{tpu_custom_call.1} parent=5 // pred_region
        %s252 = ssub.s32 %s15, 1
        %s253 = smul.u32 2, %s25
        %p254 = scmp.lt.s32.totalorder %s24, 1
        %s255 = scalar_select %p254, %s24, 1
        %p256 = scmp.lt.s32.totalorder %s253, 1
        %s257 = scalar_select %p256, %s253, 1
        %s258 = smul.addr %s255, 2
        %s259 = sadd.s32 %s257, %s258
        %s260 = smul.addr %s259, 4
        %s261 = scalar_lea.vmem %s0, %s260
        %p262 = pneg %p55
        %p263 = pneg %p52
        %s264 = smul.u32 2, %s25
        %p265 = scmp.lt.s32.totalorder %s264, 1
        %s266 = scalar_select %p265, %s264, 1
        %s267 = smul.addr %s266, 2
        %s268 = scalar_lea.vmem %s1, %s267
        %p269 = pneg %p81
        %p270 = pneg %p78
        %p271 = pneg %p102
        %p272 = pneg %p99
        %p273 = pneg %p123
        %p274 = pneg %p120
        %p275 = pneg %p144
        %p276 = pneg %p141
        %p277 = pneg %p165
        %p278 = pneg %p162
        %p279 = pneg %p193
        %p280 = pneg %p190
        %s281 = sand.u32 %s180, 1
        %s282 = scalar_lea.sflag [#allocation3], %s281
        %s283 = sand.u32 %s180, 1
        %s284 = smul.addr %s283, 8
        %s285 = scalar_lea.vmem [#allocation2], %s284
        %s286 = smul.u32 2, %s25
        %p287 = scmp.lt.s32.totalorder %s24, 1
        %s288 = scalar_select %p287, %s24, 1
        %p289 = scmp.lt.s32.totalorder %s286, 1
        %s290 = scalar_select %p289, %s286, 1
        %s291 = smul.addr %s288, 2
        %s292 = sadd.s32 %s290, %s291
        %s293 = smul.addr %s292, 4
        %s294 = scalar_lea.vmem %s0, %s293
        %s295 = smul.u32 2, %s25
        %s296 = smul.u32 2, %s25
        %p297 = scmp.lt.s32.totalorder %s296, 1
        %s298 = scalar_select %p297, %s296, 1
        %s299 = smul.addr %s298, 2
        %s300 = scalar_lea.vmem %s1, %s299
        %s301 = smul.u32 2, %s25
        %s302 = smul.u32 2, %s25
        %v303 = vld [vmem:[%s294] sm:$0xff]
        %v304 = vld [vmem:[%s2] sm:$0xff]
        %v305 = vld [vmem:[%s3] sm:$0xff]
        %v306 = vld [vmem:[%s300] ss:$2 sm:$0x3]
        %308 = vset.pattern.permute.xlu0 0
        %309 = vperm.xlu0 %308, %v305
        %v310 = vpop.permute.xlu0 %309
        %v313 = vlaneseq
        %v314 = vshrl.u32 %v313, 7
        %v315 = vsub.s32 0, %v314
        %v316 = vrot.slane %v306, %v315
        %v317 = vlaneseq
        %v318 = vshrl.u32 %v317, 7
        %v319 = vsub.s32 1, %v318
        %v320 = vrot.slane %v306, %v319
        %v323 = vmul.f32 %v310, %v316
        %v324 = vmul.f32 %v310, %v320
        %v326 = vcombine.high %v303, %v303
        %vm327 = vcmask 31744
        %v329 = vsel %vm327, %v304, 0
        %vm331 = vcmask 1043456
        %v332 = vsel %vm331, %v303, 0
        %v334 = vsel %vm331, %v326, 0
        %336 = vmatprep.subr.mxu0 %v334
        %337 = vmatpush1.msra.mxu0 %v332
        %338 = vmatprep.subr.mxu0 0.0
        %339 = vmatpush1.msra.mxu0 0.0
        %340 = vmatprep.subr.mxu0 0.0
        %341 = vmatpush1.msra.mxu0 0.0
        %342 = vmatprep.subr.mxu0 0.0
        %343 = vmatpush1.msra.mxu0 0.0
        %344 = vmatprep.subr.mxu0 0.0
        %345 = vmatpush1.msra.mxu0 0.0
        %346 = vmatprep.subr.mxu0 0.0
        %347 = vmatpush1.msra.mxu0 0.0
        %348 = vmatprep.subr.mxu0 0.0
        %349 = vmatpush1.msra.mxu0 0.0
        %350 = vmatprep.subr.mxu0 0.0
        %351 = vmatpush1.msra.mxu0 0.0
        %352 = vmatprep.subr.mxu0 0.0
        %353 = vmatpush1.msra.mxu0 0.0
        %354 = vmatprep.subr.mxu0 0.0
        %355 = vmatpush1.msra.mxu0 0.0
        %356 = vmatprep.subr.mxu0 0.0
        %357 = vmatpush1.msra.mxu0 0.0
        %358 = vmatprep.subr.mxu0 0.0
        %359 = vmatpush1.msra.mxu0 0.0
        %360 = vmatprep.subr.mxu0 0.0
        %361 = vmatpush1.msra.mxu0 0.0
        %362 = vmatprep.subr.mxu0 0.0
        %363 = vmatpush1.msra.mxu0 0.0
        %364 = vmatprep.subr.mxu0 0.0
        %365 = vmatpush1.msra.mxu0 0.0
        %366 = vmatprep.subr.mxu0 0.0
        %367 = vmatpush1.msra.mxu0 0.0
        %368 = vmatprep.subr.mxu0 0.0
        %369 = vmatpush1.msra.mxu0 0.0
        %370 = vmatprep.subr.mxu0 0.0
        %371 = vmatpush1.msra.mxu0 0.0
        %372 = vmatprep.subr.mxu0 0.0
        %373 = vmatpush1.msra.mxu0 0.0
        %374 = vmatprep.subr.mxu0 0.0
        %375 = vmatpush1.msra.mxu0 0.0
        %376 = vmatprep.subr.mxu0 0.0
        %377 = vmatpush1.msra.mxu0 0.0
        %378 = vmatprep.subr.mxu0 0.0
        %379 = vmatpush1.msra.mxu0 0.0
        %380 = vmatprep.subr.mxu0 0.0
        %381 = vmatpush1.msra.mxu0 0.0
        %382 = vmatprep.subr.mxu0 0.0
        %383 = vmatpush1.msra.mxu0 0.0
        %384 = vmatprep.subr.mxu0 0.0
        %385 = vmatpush1.msra.mxu0 0.0
        %386 = vmatprep.subr.mxu0 0.0
        %387 = vmatpush1.msra.mxu0 0.0
        %388 = vmatprep.subr.mxu0 0.0
        %389 = vmatpush1.msra.mxu0 0.0
        %390 = vmatprep.subr.mxu0 0.0
        %391 = vmatpush1.msra.mxu0 0.0
        %392 = vmatprep.subr.mxu0 0.0
        %393 = vmatpush1.msra.mxu0 0.0
        %394 = vmatprep.subr.mxu0 0.0
        %395 = vmatpush1.msra.mxu0 0.0
        %396 = vmatprep.subr.mxu0 0.0
        %397 = vmatpush1.msra.mxu0 0.0
        %398 = vmatprep.subr.mxu0 0.0
        %399 = vmatpush1.msra.mxu0 0.0
        %400 = vmatprep.mubr.f32.mxu0 0.0
        %401 = vmatmul.mubr.f32.gmra.mrb[0].mxu0 %v329
        %v402 = vpop.f32.mrb[0].mxu0
        %v403 = vadd.f32 %v323, %v402
        %v404 = vpop.f32.mrb[0].mxu0
        %v405 = vadd.f32 %v324, %v404
        %406 = vdwg.mxu0
        %v407 = vld [vmem:[%s3] sm:$0xff]
        %s408 = scalar_lea.vmem %s300, 1
        %v409 = vld [vmem:[%s408] ss:$2 sm:$0x3]
        %411 = vset.pattern.permute.xlu0 1
        %412 = vperm.xlu0 %411, %v407
        %v413 = vpop.permute.xlu0 %412
        %v416 = vlaneseq
        %v417 = vshrl.u32 %v416, 7
        %v418 = vsub.s32 0, %v417
        %v419 = vrot.slane %v409, %v418
        %v420 = vlaneseq
        %v421 = vshrl.u32 %v420, 7
        %v422 = vsub.s32 1, %v421
        %v423 = vrot.slane %v409, %v422
        %v426 = vmul.f32 %v413, %v419
        %v427 = vmul.f32 %v413, %v423
        %v428 = vadd.f32 %v403, %v426
        %v429 = vadd.f32 %v405, %v427
        %430 = vset.pattern.permute.xlu0 2
        %431 = vperm.xlu0 %430, %v407
        %v432 = vpop.permute.xlu0 %431
        %v434 = vadd.f32 %v428, %v432
        %v435 = vadd.f32 %v429, %v432
        %v436 = vmax.f32 %v434, 0.0
        %v437 = vmax.f32 %v435, 0.0
        %v438 = vld [vmem:[%s4] sm:$0xf]
        %v439 = vld [vmem:[%s5] sm:$0xf]
        %441 = vset.pattern.permute.xlu0 0
        %442 = vperm.xlu0 %441, %v439
        %v443 = vpop.permute.xlu0 %442
        %vm445 = vcmask 64512
        %v447 = vsel %vm445, %v438, 0
        %449 = vmatprep.subr.mxu0 %v437
        %450 = vmatpush1.msra.mxu0 %v436
        %451 = vmatprep.subr.mxu0 0.0
        %452 = vmatpush1.msra.mxu0 0.0
        %453 = vmatprep.subr.mxu0 0.0
        %454 = vmatpush1.msra.mxu0 0.0
        %455 = vmatprep.subr.mxu0 0.0
        %456 = vmatpush1.msra.mxu0 0.0
        %457 = vmatprep.subr.mxu0 0.0
        %458 = vmatpush1.msra.mxu0 0.0
        %459 = vmatprep.subr.mxu0 0.0
        %460 = vmatpush1.msra.mxu0 0.0
        %461 = vmatprep.subr.mxu0 0.0
        %462 = vmatpush1.msra.mxu0 0.0
        %463 = vmatprep.subr.mxu0 0.0
        %464 = vmatpush1.msra.mxu0 0.0
        %465 = vmatprep.subr.mxu0 0.0
        %466 = vmatpush1.msra.mxu0 0.0
        %467 = vmatprep.subr.mxu0 0.0
        %468 = vmatpush1.msra.mxu0 0.0
        %469 = vmatprep.subr.mxu0 0.0
        %470 = vmatpush1.msra.mxu0 0.0
        %471 = vmatprep.subr.mxu0 0.0
        %472 = vmatpush1.msra.mxu0 0.0
        %473 = vmatprep.subr.mxu0 0.0
        %474 = vmatpush1.msra.mxu0 0.0
        %475 = vmatprep.subr.mxu0 0.0
        %476 = vmatpush1.msra.mxu0 0.0
        %477 = vmatprep.subr.mxu0 0.0
        %478 = vmatpush1.msra.mxu0 0.0
        %479 = vmatprep.subr.mxu0 0.0
        %480 = vmatpush1.msra.mxu0 0.0
        %481 = vmatprep.subr.mxu0 0.0
        %482 = vmatpush1.msra.mxu0 0.0
        %483 = vmatprep.subr.mxu0 0.0
        %484 = vmatpush1.msra.mxu0 0.0
        %485 = vmatprep.subr.mxu0 0.0
        %486 = vmatpush1.msra.mxu0 0.0
        %487 = vmatprep.subr.mxu0 0.0
        %488 = vmatpush1.msra.mxu0 0.0
        %489 = vmatprep.subr.mxu0 0.0
        %490 = vmatpush1.msra.mxu0 0.0
        %491 = vmatprep.subr.mxu0 0.0
        %492 = vmatpush1.msra.mxu0 0.0
        %493 = vmatprep.subr.mxu0 0.0
        %494 = vmatpush1.msra.mxu0 0.0
        %495 = vmatprep.subr.mxu0 0.0
        %496 = vmatpush1.msra.mxu0 0.0
        %497 = vmatprep.subr.mxu0 0.0
        %498 = vmatpush1.msra.mxu0 0.0
        %499 = vmatprep.subr.mxu0 0.0
        %500 = vmatpush1.msra.mxu0 0.0
        %501 = vmatprep.subr.mxu0 0.0
        %502 = vmatpush1.msra.mxu0 0.0
        %503 = vmatprep.subr.mxu0 0.0
        %504 = vmatpush1.msra.mxu0 0.0
        %505 = vmatprep.subr.mxu0 0.0
        %506 = vmatpush1.msra.mxu0 0.0
        %507 = vmatprep.subr.mxu0 0.0
        %508 = vmatpush1.msra.mxu0 0.0
        %509 = vmatprep.subr.mxu0 0.0
        %510 = vmatpush1.msra.mxu0 0.0
        %511 = vmatprep.subr.mxu0 0.0
        %512 = vmatpush1.msra.mxu0 0.0
        %513 = vmatprep.mubr.f32.mxu0 0.0
        %514 = vmatmul.mubr.f32.gmra.mrb[0].mxu0 %v447
        %v515 = vpop.f32.mrb[0].mxu0
        %v516 = vadd.f32 %v443, %v515
        %v517 = vpop.f32.mrb[0].mxu0
        %v518 = vadd.f32 %v443, %v517
        %519 = vdwg.mxu0
        %v520 = vsub.f32 0.0, %v516
        %v521 = vsub.f32 0.0, %v518
        %v522 = vmul.f32 %v520, 1.442695
        %v523 = vpow.pop %v522
        %v524 = vmul.f32 %v521, 1.442695
        %v525 = vpow.pop %v524
        %v526 = vadd.f32 %v523, 1.0
        %v527 = vadd.f32 %v525, 1.0
        %v528 = vrcp.pop %v526
        %v529 = vrcp.pop %v527
        %v532 = vcombine.low %v528, %v529
        %v534 = vmul.f32 %v303, %v532
        %v535 = vadd.f32 %v534, %v303
        %536 = vst [vmem:[%s285] sm:$0xff] %v535
        %s537 = sand.u32 %s180, 1
        %s538 = scalar_lea.sflag [#allocation3], %s537
        %s539 = sand.u32 %s180, 1
        %s540 = smul.addr %s539, 8
        %s541 = scalar_lea.vmem [#allocation2], %s540
        // Predicated region
        $region45: #{tpu_custom_call.1} parent=43 // pred_check
          %p542 = pneg %p190
        $region46: #{tpu_custom_call.1} parent=43 // pred_check_branch
          %544 = sbr.rel (%p542) target = $region48
        $region47: #{tpu_custom_call.1} parent=43 // pred_region
          %s545 = smul.u32 2, %s25
          %s547 = ssub.s32 128, 128
          %548 = vsyncadd %s538, %s547
          %s549 = smul.addr %s24, 2
          %s550 = sadd.s32 %s545, %s549
          %s551 = smul.addr %s550, 64
          %s552 = scalar_lea.hbm %s6, %s551
          %s554 = sshll.u32 %s541, 4
          %s555 = int_to_ptr.vmem [resolvable:$true] %s554
          %557 = dma.vmem_to_hbm [thread:$0]  %s555, 128, %s552, %s538
        $region48: #{tpu_custom_call.1} parent=43 // pred_fallthru
          _
      $region44: #{tpu_custom_call.1} parent=5 // pred_fallthru
        _
      %p558 = scmp.le.s32.totalorder 2, %s15
      // Predicated region
      $region49: #{tpu_custom_call.1} parent=5 // pred_check
        %p559 = pneg %p558
      $region50: #{tpu_custom_call.1} parent=5 // pred_check_branch
        %561 = sbr.rel (%p559) target = $region52
      $region51: #{tpu_custom_call.1} parent=5 // pred_region
        %s562 = ssub.s32 %s15, 2
        // Predicated region
        $region53: #{tpu_custom_call.1} parent=51 // pred_check
          %p563 = pneg %p196
        $region54: #{tpu_custom_call.1} parent=51 // pred_check_branch
          %565 = sbr.rel (%p563) target = $region56
        $region55: #{tpu_custom_call.1} parent=51 // pred_region
          %s566 = sand.u32 %s181, 1
          %s567 = scalar_lea.sflag [#allocation3], %s566
          %s568 = sand.u32 %s181, 1
          %s569 = smul.addr %s568, 8
          %s570 = scalar_lea.vmem [#allocation2], %s569
          %571 = dma.done %s567, 128
        $region56: #{tpu_custom_call.1} parent=51 // pred_fallthru
          _
      $region52: #{tpu_custom_call.1} parent=5 // pred_fallthru
        _
    $region6: #{tpu_custom_call.1} parent=1 // loop_footer
      %s19 = sadd.s32 1, %s15
    $region7: #{tpu_custom_call.1} parent=1 // loop_footer_branch
      %14 = sbr.rel target = $region3
    $region8: #{tpu_custom_call.1} parent=1 // loop_exit
      _
    %572 = vsyncpa [#allocation3], 1
    %s573 = scalar_lea.sflag [#allocation3], 1
    %574 = vsyncpa %s573, 1

</llo_original>
